<compile_context>
chip_gen: v7x
topology: tpu7x:2x2x1
jax: 0.10.0
libtpu: 0.0.40
codegen_flags: <defaults>
</compile_context>

<pallas_src>
import functools

import jax
import jax.numpy as jnp
from jax.experimental import pallas as pl
from jax.experimental.pallas import tpu as pltpu

D_IN, D_H1, D_H2, D_OUT = 43, 29, 16, 3


def mlp_kernel(x_ref, w1_ref, b1_ref, w2_ref, b2_ref, w3_ref, b3_ref, o_ref):
    # x_ref: (D_IN, tile_b)  -- batch on the 128-lane axis.
    x = x_ref[...]

    # fc1 + ReLU : (D_H1, D_IN) @ (D_IN, tile) -> (D_H1, tile), f32 accumulate.
    h1 = jnp.dot(w1_ref[...], x, preferred_element_type=jnp.float32)
    h1 = jnp.maximum(h1 + b1_ref[...], 0.0)

    # fc2 + ReLU : (D_H2, D_H1) @ (D_H1, tile) -> (D_H2, tile).
    h2 = jnp.dot(w2_ref[...], h1.astype(w2_ref.dtype),
                 preferred_element_type=jnp.float32)
    h2 = jnp.maximum(h2 + b2_ref[...], 0.0)

    # fc3 (no activation) : (D_OUT, D_H2) @ (D_H2, tile) -> (D_OUT, tile).
    o = jnp.dot(w3_ref[...], h2.astype(w3_ref.dtype),
                preferred_element_type=jnp.float32)
    o_ref[...] = (o + b3_ref[...]).astype(o_ref.dtype)


def _round_up(n, m):
    return pl.cdiv(n, m) * m


def _choose_tile(B, tile_b):
    """Lane-dense (multiple-of-128) batch tile.

    Mid-size batches are split into 2 balanced tiles so the 1-D grid has an
    even number of "parallel" steps (both v7x TensorCores busy); very large
    batches use the big tile_b so per-step DMA amortizes pipeline overhead.
    """
    if B <= 128:
        return 128
    if B <= 2 * tile_b:
        return _round_up(pl.cdiv(B, 2), 128)
    return tile_b


@functools.partial(jax.jit, static_argnames=("tile_b",))
def ball_vec_forward_fm(xt, w1, b1, w2, b2, w3, b3, *, tile_b=8192):
    """Feature-major fast path.

    xt : (43, B) activations, batch on the last (lane) axis. bf16 recommended.
    w* : (in, out) — i.e. PyTorch fc.weight.T.   b* : (out,).
    Returns (3, B) float32 (feature-major, lane-dense). Consumers that need
    (B, 3) should transpose at the point of use.
    """
    assert xt.shape[0] == D_IN
    B = xt.shape[1]
    tile = _choose_tile(B, tile_b)
    grid = (pl.cdiv(B, tile),)  # ragged last block handled by Pallas

    cdt = xt.dtype
    # Transposed (out, in) weights so the kernel computes W @ X + b == x @ W.T + b.
    w1t = w1.T.astype(cdt)
    w2t = w2.T.astype(cdt)
    w3t = w3.T.astype(cdt)
    # Biases as f32 columns; they add onto the f32 accumulator.
    b1c = b1.reshape(D_H1, 1).astype(jnp.float32)
    b2c = b2.reshape(D_H2, 1).astype(jnp.float32)
    b3c = b3.reshape(D_OUT, 1).astype(jnp.float32)

    # Rough VMEM footprint: double-buffered x/out blocks + f32 intermediates +
    # resident weights/slack.  Only raise the scoped limit when a huge tile
    # would exceed v5e's 16 MiB default; cap at 48 MiB (v7x has 64 MiB total).
    itemsize = jnp.dtype(cdt).itemsize
    est = (2 * D_IN * tile * itemsize
           + 2 * D_OUT * tile * 4
           + (D_H1 + D_H2) * tile * 4
           + (1 << 20))
    vmem_limit = (min(_round_up(2 * est, 1 << 20), 48 << 20)
                  if est > (12 << 20) else None)

    full = lambda shape: pl.BlockSpec(shape, lambda i: (0, 0))  # resident weights/biases

    out_t = pl.pallas_call(
        mlp_kernel,
        out_shape=jax.ShapeDtypeStruct((D_OUT, B), jnp.float32),
        grid_spec=pltpu.PrefetchScalarGridSpec(
            num_scalar_prefetch=0,
            grid=grid,
            in_specs=[
                pl.BlockSpec((D_IN, tile), lambda i: (0, i)),   # x tile (lane-dense)
                full((D_H1, D_IN)),                             # W1^T
                full((D_H1, 1)),                                # b1
                full((D_H2, D_H1)),                             # W2^T
                full((D_H2, 1)),                                # b2
                full((D_OUT, D_H2)),                            # W3^T
                full((D_OUT, 1)),                               # b3
            ],
            out_specs=pl.BlockSpec((D_OUT, tile), lambda i: (0, i)),  # lane-dense store
        ),
        compiler_params=pltpu.CompilerParams(
            dimension_semantics=("parallel",),
            vmem_limit_bytes=vmem_limit,
        ),
    )(xt, w1t, b1c, w2t, b2c, w3t, b3c)
    return out_t


def ball_vec_forward(x, w1, b1, w2, b2, w3, b3, *,
                     tile_b=8192, compute_dtype=jnp.bfloat16):
    """Convenience wrapper with the PyTorch module signature: (B, 43) -> (B, 3).

    NOTE: prefer ball_vec_forward_fm with cached feature-major (and bf16)
    activations — the transpose here costs an extra HBM round trip on a
    bandwidth-bound kernel.  compute_dtype=None keeps x's dtype (exact f32).
    """
    xt = x.T
    if compute_dtype is not None:
        xt = xt.astype(compute_dtype)
    out_t = ball_vec_forward_fm(xt, w1, b1, w2, b2, w3, b3, tile_b=tile_b)
    return out_t.T


def init_params(key):
    """Deterministic init mimicking PyTorch nn.Linear (uniform +/- 1/sqrt(fan_in))."""
    ks = jax.random.split(key, 6)

    def linear(kw, kb, fan_in, fan_out):
        bound = 1.0 / jnp.sqrt(fan_in)
        # stored (in, out); the kernel wrapper transposes for feature-major compute
        w = jax.random.uniform(kw, (fan_in, fan_out), jnp.float32, -bound, bound)
        b = jax.random.uniform(kb, (fan_out,), jnp.float32, -bound, bound)
        return w, b

    w1, b1 = linear(ks[0], ks[1], D_IN, D_H1)
    w2, b2 = linear(ks[2], ks[3], D_H1, D_H2)
    w3, b3 = linear(ks[4], ks[5], D_H2, D_OUT)
    return w1, b1, w2, b2, w3, b3


def reference_forward(x, w1, b1, w2, b2, w3, b3):
    h1 = jnp.maximum(x @ w1 + b1, 0.0)
    h2 = jnp.maximum(h1 @ w2 + b2, 0.0)
    return h2 @ w3 + b3


if __name__ == "__main__":
    key = jax.random.PRNGKey(0)
    k_p, k_x1, k_x2 = jax.random.split(key, 3)
    params = init_params(k_p)

    # 1) Feature-major f32 path, small ragged batch (single 128-lane tile),
    #    exact comparison against the JAX reference.
    B1 = 16
    xt1 = jax.random.normal(k_x1, (D_IN, B1), jnp.float32)
    out1 = jax.block_until_ready(ball_vec_forward_fm(xt1, *params))
    ref1 = reference_forward(xt1.T, *params).T
    assert out1.shape == (D_OUT, B1)
    assert jnp.allclose(out1, ref1, atol=1e-5, rtol=1e-5)

    # 2) Feature-major bf16 path (recommended default), mid-size batch ->
    #    2 balanced "parallel" grid steps (both v7x TCs) with a ragged last
    #    block.  Relaxed tolerances: bf16 MXU inputs, f32 accumulation.
    B2 = 2500
    xt2 = jax.random.normal(k_x2, (D_IN, B2), jnp.float32).astype(jnp.bfloat16)
    out2 = jax.block_until_ready(ball_vec_forward_fm(xt2, *params))
    ref2 = reference_forward(xt2.astype(jnp.float32).T, *params).T
    assert out2.shape == (D_OUT, B2)
    assert jnp.allclose(out2, ref2, atol=5e-2, rtol=5e-2)

    # 3) Batch-major convenience wrapper (module-equivalent signature), f32 exact.
    x3 = xt1.T
    out3 = jax.block_until_ready(
        ball_vec_forward(x3, *params, compute_dtype=None))
    assert out3.shape == (B1, D_OUT)
    assert jnp.allclose(out3, ref1.T, atol=1e-5, rtol=1e-5)

    print("KERNEL_OK")
</pallas_src>

<mosaic_0001>
module attributes {stable_mosaic.version = 11 : i64} {
  func.func @mlp_kernel(%arg0: i32, %arg1: memref<43x128xf32, #tpu.memory_space<vmem>>, %arg2: memref<29x43xf32, #tpu.memory_space<vmem>>, %arg3: memref<29x1xf32, #tpu.memory_space<vmem>>, %arg4: memref<16x29xf32, #tpu.memory_space<vmem>>, %arg5: memref<16x1xf32, #tpu.memory_space<vmem>>, %arg6: memref<3x16xf32, #tpu.memory_space<vmem>>, %arg7: memref<3x1xf32, #tpu.memory_space<vmem>>, %arg8: memref<3x128xf32, #tpu.memory_space<vmem>>) attributes {dimension_semantics = [#tpu.dimension_semantics<parallel>], iteration_bounds = array<i64: 1>, scalar_prefetch = 0 : i64, scratch_operands = 0 : i64, tpu.core_type = #tpu.core_type<tc>, window_params = [{transform_indices = @transform_0, window_bounds = array<i64: 43, 128>}, {pipeline_mode = #tpu.pipeline_mode<synchronous>, transform_indices = @transform_1, window_bounds = array<i64: 29, 43>}, {pipeline_mode = #tpu.pipeline_mode<synchronous>, transform_indices = @transform_2, window_bounds = array<i64: 29, 1>}, {pipeline_mode = #tpu.pipeline_mode<synchronous>, transform_indices = @transform_3, window_bounds = array<i64: 16, 29>}, {pipeline_mode = #tpu.pipeline_mode<synchronous>, transform_indices = @transform_4, window_bounds = array<i64: 16, 1>}, {pipeline_mode = #tpu.pipeline_mode<synchronous>, transform_indices = @transform_5, window_bounds = array<i64: 3, 16>}, {pipeline_mode = #tpu.pipeline_mode<synchronous>, transform_indices = @transform_6, window_bounds = array<i64: 3, 1>}, {transform_indices = @transform_7, window_bounds = array<i64: 3, 128>}]} {
    %c0 = arith.constant 0 : index
    %c0_0 = arith.constant 0 : index
    %0 = vector.load %arg1[%c0, %c0_0] : memref<43x128xf32, #tpu.memory_space<vmem>>, vector<43x128xf32>
    %c0_1 = arith.constant 0 : index
    %c0_2 = arith.constant 0 : index
    %1 = vector.load %arg2[%c0_1, %c0_2] : memref<29x43xf32, #tpu.memory_space<vmem>>, vector<29x43xf32>
    %cst = arith.constant dense<0.000000e+00> : vector<29x128xf32>
    %2 = tpu.matmul %1, %0, %cst {dimension_numbers = #tpu.dot_dimension_numbers<[1], [0], [0], [1], [0, 0, 1, 1], [], []>} : vector<29x43xf32>, vector<43x128xf32>, vector<29x128xf32> -> vector<29x128xf32>
    %c0_3 = arith.constant 0 : index
    %c0_4 = arith.constant 0 : index
    %3 = vector.load %arg3[%c0_3, %c0_4] : memref<29x1xf32, #tpu.memory_space<vmem>>, vector<29x1xf32>
    %4 = vector.broadcast %3 : vector<29x1xf32> to vector<29x128xf32>
    %5 = arith.addf %2, %4 : vector<29x128xf32>
    %cst_5 = arith.constant 0.000000e+00 : f32
    %6 = vector.broadcast %cst_5 : f32 to vector<29x128xf32>
    %7 = arith.maximumf %5, %6 : vector<29x128xf32>
    %c0_6 = arith.constant 0 : index
    %c0_7 = arith.constant 0 : index
    %8 = vector.load %arg4[%c0_6, %c0_7] : memref<16x29xf32, #tpu.memory_space<vmem>>, vector<16x29xf32>
    %cst_8 = arith.constant dense<0.000000e+00> : vector<16x128xf32>
    %9 = tpu.matmul %8, %7, %cst_8 {dimension_numbers = #tpu.dot_dimension_numbers<[1], [0], [0], [1], [0, 0, 1, 1], [], []>} : vector<16x29xf32>, vector<29x128xf32>, vector<16x128xf32> -> vector<16x128xf32>
    %c0_9 = arith.constant 0 : index
    %c0_10 = arith.constant 0 : index
    %10 = vector.load %arg5[%c0_9, %c0_10] : memref<16x1xf32, #tpu.memory_space<vmem>>, vector<16x1xf32>
    %11 = vector.broadcast %10 : vector<16x1xf32> to vector<16x128xf32>
    %12 = arith.addf %9, %11 : vector<16x128xf32>
    %cst_11 = arith.constant 0.000000e+00 : f32
    %13 = vector.broadcast %cst_11 : f32 to vector<16x128xf32>
    %14 = arith.maximumf %12, %13 : vector<16x128xf32>
    %c0_12 = arith.constant 0 : index
    %c0_13 = arith.constant 0 : index
    %15 = vector.load %arg6[%c0_12, %c0_13] : memref<3x16xf32, #tpu.memory_space<vmem>>, vector<3x16xf32>
    %cst_14 = arith.constant dense<0.000000e+00> : vector<3x128xf32>
    %16 = tpu.matmul %15, %14, %cst_14 {dimension_numbers = #tpu.dot_dimension_numbers<[1], [0], [0], [1], [0, 0, 1, 1], [], []>} : vector<3x16xf32>, vector<16x128xf32>, vector<3x128xf32> -> vector<3x128xf32>
    %c0_15 = arith.constant 0 : index
    %c0_16 = arith.constant 0 : index
    %17 = vector.load %arg7[%c0_15, %c0_16] : memref<3x1xf32, #tpu.memory_space<vmem>>, vector<3x1xf32>
    %18 = vector.broadcast %17 : vector<3x1xf32> to vector<3x128xf32>
    %19 = arith.addf %16, %18 : vector<3x128xf32>
    %c0_17 = arith.constant 0 : index
    %c0_18 = arith.constant 0 : index
    %20 = vector.load %arg8[%c0_17, %c0_18] : memref<3x128xf32, #tpu.memory_space<vmem>>, vector<3x128xf32>
    tpu.vector_store %arg8[%c0_17, %c0_18], %19 {strides = array<i32>} : memref<3x128xf32, #tpu.memory_space<vmem>>, vector<3x128xf32>,
    return
  }
  func.func @transform_0(%arg0: i32) -> (i32, i32) {
    %c0_i32 = arith.constant 0 : i32
    %c0_i32_0 = arith.constant 0 : i32
    return %c0_i32, %arg0 : i32, i32
  }
  func.func @transform_1(%arg0: i32) -> (i32, i32) {
    %c0_i32 = arith.constant 0 : i32
    %c0_i32_0 = arith.constant 0 : i32
    %c0_i32_1 = arith.constant 0 : i32
    return %c0_i32, %c0_i32_0 : i32, i32
  }
  func.func @transform_2(%arg0: i32) -> (i32, i32) {
    %c0_i32 = arith.constant 0 : i32
    %c0_i32_0 = arith.constant 0 : i32
    %c0_i32_1 = arith.constant 0 : i32
    return %c0_i32, %c0_i32_0 : i32, i32
  }
  func.func @transform_3(%arg0: i32) -> (i32, i32) {
    %c0_i32 = arith.constant 0 : i32
    %c0_i32_0 = arith.constant 0 : i32
    %c0_i32_1 = arith.constant 0 : i32
    return %c0_i32, %c0_i32_0 : i32, i32
  }
  func.func @transform_4(%arg0: i32) -> (i32, i32) {
    %c0_i32 = arith.constant 0 : i32
    %c0_i32_0 = arith.constant 0 : i32
    %c0_i32_1 = arith.constant 0 : i32
    return %c0_i32, %c0_i32_0 : i32, i32
  }
  func.func @transform_5(%arg0: i32) -> (i32, i32) {
    %c0_i32 = arith.constant 0 : i32
    %c0_i32_0 = arith.constant 0 : i32
    %c0_i32_1 = arith.constant 0 : i32
    return %c0_i32, %c0_i32_0 : i32, i32
  }
  func.func @transform_6(%arg0: i32) -> (i32, i32) {
    %c0_i32 = arith.constant 0 : i32
    %c0_i32_0 = arith.constant 0 : i32
    %c0_i32_1 = arith.constant 0 : i32
    return %c0_i32, %c0_i32_0 : i32, i32
  }
  func.func @transform_7(%arg0: i32) -> (i32, i32) {
    %c0_i32 = arith.constant 0 : i32
    %c0_i32_0 = arith.constant 0 : i32
    return %c0_i32, %arg0 : i32, i32
  }
}

</mosaic_0001>

<llo_original>
// kernel: ball_vec_forward_fm.1
$region0: #{ball_vec_forward_fm.1}
  #allocation0 [shape = 'u32[]', space=smem, size = 0x4, offset = 0x4, fixed_abs, tag = 'smem constant byte address 0x4 - core index']
  #allocation1 [shape = 'u32[144,128]{1,0:T(1,128)}', space=vmem, size = 0x12000, scoped, tag = 'internal scratch']
  %s0 = inlined_call_operand.vmem [shape: f32[43,16], index: 0, kind: input, shape index: {}]
  %s1 = inlined_call_operand.vmem [shape: f32[29,43], index: 1, kind: input, shape index: {}]
  %s2 = inlined_call_operand.vmem [shape: f32[29,1], index: 2, kind: input, shape index: {}]
  %s3 = inlined_call_operand.vmem [shape: f32[16,29], index: 3, kind: input, shape index: {}]
  %s4 = inlined_call_operand.vmem [shape: f32[16,1], index: 4, kind: input, shape index: {}]
  %s5 = inlined_call_operand.vmem [shape: f32[3,16], index: 5, kind: input, shape index: {}]
  %s6 = inlined_call_operand.vmem [shape: f32[3,1], index: 6, kind: input, shape index: {}]
  %s7 = inlined_call_operand.hbm [shape: f32[3,16], index: 7, kind: output, shape index: {}]
  %s8 = sld [smem:[#allocation0]]
  $region38: #{ball_vec_forward_fm.1} parent=0
    _
  %s10 = ssub.s32 1, %s8
  %s11 = scalar_select 0, %s10, %s8
  $region1: #{ball_vec_forward_fm.1} parent=0
    #allocation2 [shape = 'u8[2048]{0}', space=vmem, size = 0x800, scoped, tag = 'output window, operand 0, single buffered']
    #allocation3 [shape = 's32[1]{0}', space=sflag, size = 0x4, scoped, tag = 'scoped memory for ball_vec_forward_fm.1']
    %12 = vsyncpa [#allocation3], 0
    // Predicated region
    $region2: #{ball_vec_forward_fm.1} parent=1 // pred_check
      _
    $region3: #{ball_vec_forward_fm.1} parent=1 // pred_check_branch
      %14 = sbr.rel (0) target = $region5
    $region4: #{ball_vec_forward_fm.1} parent=1 // pred_region
      _
    $region5: #{ball_vec_forward_fm.1} parent=1 // pred_fallthru
      _
    // Predicated region
    $region6: #{ball_vec_forward_fm.1} parent=1 // pred_check
      _
    $region7: #{ball_vec_forward_fm.1} parent=1 // pred_check_branch
      %16 = sbr.rel (0) target = $region9
    $region8: #{ball_vec_forward_fm.1} parent=1 // pred_region
      _
    $region9: #{ball_vec_forward_fm.1} parent=1 // pred_fallthru
      _
    // Predicated region
    $region10: #{ball_vec_forward_fm.1} parent=1 // pred_check
      _
    $region11: #{ball_vec_forward_fm.1} parent=1 // pred_check_branch
      %18 = sbr.rel (0) target = $region13
    $region12: #{ball_vec_forward_fm.1} parent=1 // pred_region
      _
    $region13: #{ball_vec_forward_fm.1} parent=1 // pred_fallthru
      _
    // Predicated region
    $region14: #{ball_vec_forward_fm.1} parent=1 // pred_check
      _
    $region15: #{ball_vec_forward_fm.1} parent=1 // pred_check_branch
      %20 = sbr.rel (0) target = $region17
    $region16: #{ball_vec_forward_fm.1} parent=1 // pred_region
      _
    $region17: #{ball_vec_forward_fm.1} parent=1 // pred_fallthru
      _
    // Predicated region
    $region18: #{ball_vec_forward_fm.1} parent=1 // pred_check
      _
    $region19: #{ball_vec_forward_fm.1} parent=1 // pred_check_branch
      %22 = sbr.rel (0) target = $region21
    $region20: #{ball_vec_forward_fm.1} parent=1 // pred_region
      _
    $region21: #{ball_vec_forward_fm.1} parent=1 // pred_fallthru
      _
    // Predicated region
    $region22: #{ball_vec_forward_fm.1} parent=1 // pred_check
      _
    $region23: #{ball_vec_forward_fm.1} parent=1 // pred_check_branch
      %24 = sbr.rel (0) target = $region25
    $region24: #{ball_vec_forward_fm.1} parent=1 // pred_region
      _
    $region25: #{ball_vec_forward_fm.1} parent=1 // pred_fallthru
      _
    // Predicated region
    $region26: #{ball_vec_forward_fm.1} parent=1 // pred_check
      _
    $region27: #{ball_vec_forward_fm.1} parent=1 // pred_check_branch
      %26 = sbr.rel (0) target = $region29
    $region28: #{ball_vec_forward_fm.1} parent=1 // pred_region
      _
    $region29: #{ball_vec_forward_fm.1} parent=1 // pred_fallthru
      _
    %v27 = vld [vmem:[%s0] sm:$0xff]
    %v28 = vld [vmem:[%s0 + $0x8] sm:$0xff]
    %v29 = vld [vmem:[%s0 + $0x10] sm:$0xff]
    %v30 = vld [vmem:[%s0 + $0x18] sm:$0xff]
    %v31 = vld [vmem:[%s0 + $0x20] sm:$0xff]
    %v32 = vld [vmem:[%s0 + $0x28] sm:$0x7]
    %v33 = vld [vmem:[%s1] sm:$0xff]
    %v34 = vld [vmem:[%s1 + $0x8] sm:$0xff]
    %v35 = vld [vmem:[%s1 + $0x10] sm:$0xff]
    %v36 = vld [vmem:[%s1 + $0x18] sm:$0x1f]
    %v37 = vld [vmem:[%s2] sm:$0xff]
    %v38 = vld [vmem:[%s2 + $0x8] sm:$0xff]
    %v39 = vld [vmem:[%s2 + $0x10] sm:$0xff]
    %v40 = vld [vmem:[%s2 + $0x18] sm:$0x1f]
    %42 = vset.pattern.permute.xlu0 0
    %43 = vperm.xlu0 %42, %v37
    %v44 = vpop.permute.xlu0 %43
    %47 = vset.pattern.permute.xlu0 0
    %48 = vperm.xlu0 %47, %v38
    %v49 = vpop.permute.xlu0 %48
    %52 = vset.pattern.permute.xlu0 0
    %53 = vperm.xlu0 %52, %v39
    %v54 = vpop.permute.xlu0 %53
    %57 = vset.pattern.permute.xlu0 0
    %58 = vperm.xlu0 %57, %v40
    %v59 = vpop.permute.xlu0 %58
    %vm61 = vcmask 351232
    %v63 = vsel %vm61, %v33, 0
    %v66 = vsel %vm61, %v34, 0
    %v69 = vsel %vm61, %v35, 0
    %v72 = vsel %vm61, %v36, 0
    %vm74 = vcmask 1042432
    %v76 = vsel %vm74, %v32, 0
    %78 = vmatprep.subr.mxu0 0.0
    %79 = vmatpush1.msra.mxu0 %v27
    %80 = vmatprep.subr.mxu0 0.0
    %81 = vmatpush1.msra.mxu0 %v28
    %82 = vmatprep.subr.mxu0 0.0
    %83 = vmatpush1.msra.mxu0 %v29
    %84 = vmatprep.subr.mxu0 0.0
    %85 = vmatpush1.msra.mxu0 %v30
    %86 = vmatprep.subr.mxu0 0.0
    %87 = vmatpush1.msra.mxu0 %v31
    %88 = vmatprep.subr.mxu0 0.0
    %89 = vmatpush1.msra.mxu0 %v76
    %90 = vmatprep.subr.mxu0 0.0
    %91 = vmatpush1.msra.mxu0 0.0
    %92 = vmatprep.subr.mxu0 0.0
    %93 = vmatpush1.msra.mxu0 0.0
    %94 = vmatprep.subr.mxu0 0.0
    %95 = vmatpush1.msra.mxu0 0.0
    %96 = vmatprep.subr.mxu0 0.0
    %97 = vmatpush1.msra.mxu0 0.0
    %98 = vmatprep.subr.mxu0 0.0
    %99 = vmatpush1.msra.mxu0 0.0
    %100 = vmatprep.subr.mxu0 0.0
    %101 = vmatpush1.msra.mxu0 0.0
    %102 = vmatprep.subr.mxu0 0.0
    %103 = vmatpush1.msra.mxu0 0.0
    %104 = vmatprep.subr.mxu0 0.0
    %105 = vmatpush1.msra.mxu0 0.0
    %106 = vmatprep.subr.mxu0 0.0
    %107 = vmatpush1.msra.mxu0 0.0
    %108 = vmatprep.subr.mxu0 0.0
    %109 = vmatpush1.msra.mxu0 0.0
    %110 = vmatprep.subr.mxu0 0.0
    %111 = vmatpush1.msra.mxu0 0.0
    %112 = vmatprep.subr.mxu0 0.0
    %113 = vmatpush1.msra.mxu0 0.0
    %114 = vmatprep.subr.mxu0 0.0
    %115 = vmatpush1.msra.mxu0 0.0
    %116 = vmatprep.subr.mxu0 0.0
    %117 = vmatpush1.msra.mxu0 0.0
    %118 = vmatprep.subr.mxu0 0.0
    %119 = vmatpush1.msra.mxu0 0.0
    %120 = vmatprep.subr.mxu0 0.0
    %121 = vmatpush1.msra.mxu0 0.0
    %122 = vmatprep.subr.mxu0 0.0
    %123 = vmatpush1.msra.mxu0 0.0
    %124 = vmatprep.subr.mxu0 0.0
    %125 = vmatpush1.msra.mxu0 0.0
    %126 = vmatprep.subr.mxu0 0.0
    %127 = vmatpush1.msra.mxu0 0.0
    %128 = vmatprep.subr.mxu0 0.0
    %129 = vmatpush1.msra.mxu0 0.0
    %130 = vmatprep.subr.mxu0 0.0
    %131 = vmatpush1.msra.mxu0 0.0
    %132 = vmatprep.subr.mxu0 0.0
    %133 = vmatpush1.msra.mxu0 0.0
    %134 = vmatprep.subr.mxu0 0.0
    %135 = vmatpush1.msra.mxu0 0.0
    %136 = vmatprep.subr.mxu0 0.0
    %137 = vmatpush1.msra.mxu0 0.0
    %138 = vmatprep.subr.mxu0 0.0
    %139 = vmatpush1.msra.mxu0 0.0
    %140 = vmatprep.subr.mxu0 0.0
    %141 = vmatpush1.msra.mxu0 0.0
    %142 = vmatprep.mubr.f32.mxu0 0.0
    %143 = vmatmul.mubr.f32.gmra.mrb[0].mxu0 %v63
    %v144 = vpop.f32.mrb[0].mxu0
    %v145 = vadd.f32 %v44, %v144
    %v146 = vpop.f32.mrb[0].mxu0
    %147 = vmatprep.mubr.f32.mxu0 0.0
    %148 = vmatmul.mubr.f32.gmra.mrb[0].mxu0 %v66
    %v149 = vpop.f32.mrb[0].mxu0
    %v150 = vadd.f32 %v49, %v149
    %v151 = vpop.f32.mrb[0].mxu0
    %152 = vmatprep.mubr.f32.mxu0 0.0
    %153 = vmatmul.mubr.f32.gmra.mrb[0].mxu0 %v69
    %v154 = vpop.f32.mrb[0].mxu0
    %v155 = vadd.f32 %v54, %v154
    %v156 = vpop.f32.mrb[0].mxu0
    %157 = vmatprep.mubr.f32.mxu0 0.0
    %158 = vmatmul.mubr.f32.gmra.mrb[0].mxu0 %v72
    %v159 = vpop.f32.mrb[0].mxu0
    %v160 = vadd.f32 %v59, %v159
    %v161 = vpop.f32.mrb[0].mxu0
    %162 = vdwg.mxu0
    %v163 = vmax.f32 %v145, 0.0
    %v164 = vmax.f32 %v150, 0.0
    %v165 = vmax.f32 %v155, 0.0
    %v166 = vmax.f32 %v160, 0.0
    %v167 = vld [vmem:[%s3] sm:$0xff]
    %v168 = vld [vmem:[%s3 + $0x8] sm:$0xff]
    %v169 = vld [vmem:[%s4] sm:$0xff]
    %v170 = vld [vmem:[%s4 + $0x8] sm:$0xff]
    %172 = vset.pattern.permute.xlu0 0
    %173 = vperm.xlu0 %172, %v169
    %v174 = vpop.permute.xlu0 %173
    %177 = vset.pattern.permute.xlu0 0
    %178 = vperm.xlu0 %177, %v170
    %v179 = vpop.permute.xlu0 %178
    %vm181 = vcmask 236544
    %v183 = vsel %vm181, %v167, 0
    %v186 = vsel %vm181, %v168, 0
    %vm188 = vcmask 1044480
    %v190 = vsel %vm188, %v166, 0
    %192 = vmatprep.subr.mxu0 0.0
    %193 = vmatpush1.msra.mxu0 %v163
    %194 = vmatprep.subr.mxu0 0.0
    %195 = vmatpush1.msra.mxu0 %v164
    %196 = vmatprep.subr.mxu0 0.0
    %197 = vmatpush1.msra.mxu0 %v165
    %198 = vmatprep.subr.mxu0 0.0
    %199 = vmatpush1.msra.mxu0 %v190
    %200 = vmatprep.subr.mxu0 0.0
    %201 = vmatpush1.msra.mxu0 0.0
    %202 = vmatprep.subr.mxu0 0.0
    %203 = vmatpush1.msra.mxu0 0.0
    %204 = vmatprep.subr.mxu0 0.0
    %205 = vmatpush1.msra.mxu0 0.0
    %206 = vmatprep.subr.mxu0 0.0
    %207 = vmatpush1.msra.mxu0 0.0
    %208 = vmatprep.subr.mxu0 0.0
    %209 = vmatpush1.msra.mxu0 0.0
    %210 = vmatprep.subr.mxu0 0.0
    %211 = vmatpush1.msra.mxu0 0.0
    %212 = vmatprep.subr.mxu0 0.0
    %213 = vmatpush1.msra.mxu0 0.0
    %214 = vmatprep.subr.mxu0 0.0
    %215 = vmatpush1.msra.mxu0 0.0
    %216 = vmatprep.subr.mxu0 0.0
    %217 = vmatpush1.msra.mxu0 0.0
    %218 = vmatprep.subr.mxu0 0.0
    %219 = vmatpush1.msra.mxu0 0.0
    %220 = vmatprep.subr.mxu0 0.0
    %221 = vmatpush1.msra.mxu0 0.0
    %222 = vmatprep.subr.mxu0 0.0
    %223 = vmatpush1.msra.mxu0 0.0
    %224 = vmatprep.subr.mxu0 0.0
    %225 = vmatpush1.msra.mxu0 0.0
    %226 = vmatprep.subr.mxu0 0.0
    %227 = vmatpush1.msra.mxu0 0.0
    %228 = vmatprep.subr.mxu0 0.0
    %229 = vmatpush1.msra.mxu0 0.0
    %230 = vmatprep.subr.mxu0 0.0
    %231 = vmatpush1.msra.mxu0 0.0
    %232 = vmatprep.subr.mxu0 0.0
    %233 = vmatpush1.msra.mxu0 0.0
    %234 = vmatprep.subr.mxu0 0.0
    %235 = vmatpush1.msra.mxu0 0.0
    %236 = vmatprep.subr.mxu0 0.0
    %237 = vmatpush1.msra.mxu0 0.0
    %238 = vmatprep.subr.mxu0 0.0
    %239 = vmatpush1.msra.mxu0 0.0
    %240 = vmatprep.subr.mxu0 0.0
    %241 = vmatpush1.msra.mxu0 0.0
    %242 = vmatprep.subr.mxu0 0.0
    %243 = vmatpush1.msra.mxu0 0.0
    %244 = vmatprep.subr.mxu0 0.0
    %245 = vmatpush1.msra.mxu0 0.0
    %246 = vmatprep.subr.mxu0 0.0
    %247 = vmatpush1.msra.mxu0 0.0
    %248 = vmatprep.subr.mxu0 0.0
    %249 = vmatpush1.msra.mxu0 0.0
    %250 = vmatprep.subr.mxu0 0.0
    %251 = vmatpush1.msra.mxu0 0.0
    %252 = vmatprep.subr.mxu0 0.0
    %253 = vmatpush1.msra.mxu0 0.0
    %254 = vmatprep.subr.mxu0 0.0
    %255 = vmatpush1.msra.mxu0 0.0
    %256 = vmatprep.mubr.f32.mxu0 0.0
    %257 = vmatmul.mubr.f32.gmra.mrb[0].mxu0 %v183
    %v258 = vpop.f32.mrb[0].mxu0
    %v259 = vadd.f32 %v174, %v258
    %v260 = vpop.f32.mrb[0].mxu0
    %261 = vmatprep.mubr.f32.mxu0 0.0
    %262 = vmatmul.mubr.f32.gmra.mrb[0].mxu0 %v186
    %v263 = vpop.f32.mrb[0].mxu0
    %v264 = vadd.f32 %v179, %v263
    %v265 = vpop.f32.mrb[0].mxu0
    %266 = vdwg.mxu0
    %v267 = vmax.f32 %v259, 0.0
    %v268 = vmax.f32 %v264, 0.0
    %v269 = vld [vmem:[%s5] sm:$0x7]
    %v270 = vld [vmem:[%s6] sm:$0x7]
    %272 = vset.pattern.permute.xlu0 0
    %273 = vperm.xlu0 %272, %v270
    %v274 = vpop.permute.xlu0 %273
    %vm276 = vcmask 130048
    %v278 = vsel %vm276, %v269, 0
    %280 = vmatprep.subr.mxu0 0.0
    %281 = vmatpush1.msra.mxu0 %v267
    %282 = vmatprep.subr.mxu0 0.0
    %283 = vmatpush1.msra.mxu0 %v268
    %284 = vmatprep.subr.mxu0 0.0
    %285 = vmatpush1.msra.mxu0 0.0
    %286 = vmatprep.subr.mxu0 0.0
    %287 = vmatpush1.msra.mxu0 0.0
    %288 = vmatprep.subr.mxu0 0.0
    %289 = vmatpush1.msra.mxu0 0.0
    %290 = vmatprep.subr.mxu0 0.0
    %291 = vmatpush1.msra.mxu0 0.0
    %292 = vmatprep.subr.mxu0 0.0
    %293 = vmatpush1.msra.mxu0 0.0
    %294 = vmatprep.subr.mxu0 0.0
    %295 = vmatpush1.msra.mxu0 0.0
    %296 = vmatprep.subr.mxu0 0.0
    %297 = vmatpush1.msra.mxu0 0.0
    %298 = vmatprep.subr.mxu0 0.0
    %299 = vmatpush1.msra.mxu0 0.0
    %300 = vmatprep.subr.mxu0 0.0
    %301 = vmatpush1.msra.mxu0 0.0
    %302 = vmatprep.subr.mxu0 0.0
    %303 = vmatpush1.msra.mxu0 0.0
    %304 = vmatprep.subr.mxu0 0.0
    %305 = vmatpush1.msra.mxu0 0.0
    %306 = vmatprep.subr.mxu0 0.0
    %307 = vmatpush1.msra.mxu0 0.0
    %308 = vmatprep.subr.mxu0 0.0
    %309 = vmatpush1.msra.mxu0 0.0
    %310 = vmatprep.subr.mxu0 0.0
    %311 = vmatpush1.msra.mxu0 0.0
    %312 = vmatprep.subr.mxu0 0.0
    %313 = vmatpush1.msra.mxu0 0.0
    %314 = vmatprep.subr.mxu0 0.0
    %315 = vmatpush1.msra.mxu0 0.0
    %316 = vmatprep.subr.mxu0 0.0
    %317 = vmatpush1.msra.mxu0 0.0
    %318 = vmatprep.subr.mxu0 0.0
    %319 = vmatpush1.msra.mxu0 0.0
    %320 = vmatprep.subr.mxu0 0.0
    %321 = vmatpush1.msra.mxu0 0.0
    %322 = vmatprep.subr.mxu0 0.0
    %323 = vmatpush1.msra.mxu0 0.0
    %324 = vmatprep.subr.mxu0 0.0
    %325 = vmatpush1.msra.mxu0 0.0
    %326 = vmatprep.subr.mxu0 0.0
    %327 = vmatpush1.msra.mxu0 0.0
    %328 = vmatprep.subr.mxu0 0.0
    %329 = vmatpush1.msra.mxu0 0.0
    %330 = vmatprep.subr.mxu0 0.0
    %331 = vmatpush1.msra.mxu0 0.0
    %332 = vmatprep.subr.mxu0 0.0
    %333 = vmatpush1.msra.mxu0 0.0
    %334 = vmatprep.subr.mxu0 0.0
    %335 = vmatpush1.msra.mxu0 0.0
    %336 = vmatprep.subr.mxu0 0.0
    %337 = vmatpush1.msra.mxu0 0.0
    %338 = vmatprep.subr.mxu0 0.0
    %339 = vmatpush1.msra.mxu0 0.0
    %340 = vmatprep.subr.mxu0 0.0
    %341 = vmatpush1.msra.mxu0 0.0
    %342 = vmatprep.subr.mxu0 0.0
    %343 = vmatpush1.msra.mxu0 0.0
    %344 = vmatprep.mubr.f32.mxu0 0.0
    %345 = vmatmul.mubr.f32.gmra.mrb[0].mxu0 %v278
    %v346 = vpop.f32.mrb[0].mxu0
    %v347 = vadd.f32 %v274, %v346
    %v348 = vpop.f32.mrb[0].mxu0
    %349 = vdwg.mxu0
    %350 = vst [vmem:[#allocation2] sm:$0x7] %v347
    // Predicated region
    $region30: #{ball_vec_forward_fm.1} parent=1 // pred_check
      _
    $region31: #{ball_vec_forward_fm.1} parent=1 // pred_check_branch
      %352 = sbr.rel (0) target = $region33
    $region32: #{ball_vec_forward_fm.1} parent=1 // pred_region
      %s354 = ssub.s32 64, 64
      %355 = vsyncadd [#allocation3], %s354
      %s357 = sshll.u32 [#allocation2], 4
      %s358 = int_to_ptr.vmem [resolvable:$true] %s357
      %360 = dma.vmem_to_hbm [thread:$0]  %s358, 64, %s7, [#allocation3]
    $region33: #{ball_vec_forward_fm.1} parent=1 // pred_fallthru
      _
    // Predicated region
    $region34: #{ball_vec_forward_fm.1} parent=1 // pred_check
      _
    $region35: #{ball_vec_forward_fm.1} parent=1 // pred_check_branch
      %362 = sbr.rel (0) target = $region37
    $region36: #{ball_vec_forward_fm.1} parent=1 // pred_region
      %363 = dma.done [#allocation3], 64
    $region37: #{ball_vec_forward_fm.1} parent=1 // pred_fallthru
      _
    %364 = vsyncpa [#allocation3], 1

</llo_original>
